<compile_context>
chip_gen: v6e
topology: v6e:2x2x1
jax: 0.10.0
libtpu: 0.0.40
codegen_flags: <defaults>
</compile_context>

<pallas_src>
from functools import partial

import jax
import jax.numpy as jnp
from jax.experimental import pallas as pl
from jax.experimental.pallas import tpu as pltpu


def _make_scaled_conv1x1_kernel(compute_dtype):
    def kernel(x_ref, s_ref, w_ref, o_ref):
        # x_ref: (Cin, HW)   flattened CHW activation (untouched, straight to MXU)
        # s_ref: (1, Cin)    per-channel gate (x201)
        # w_ref: (Cout, Cin) 1x1 conv weight
        # o_ref: (Cout, HW)
        # Fold the gate into the (small) weight: VPU work on Cout*Cin elements
        # instead of Cin*HW for the activation.
        w_scaled = w_ref[...] * s_ref[...]          # broadcast over Cout rows
        x = x_ref[...]
        if compute_dtype != jnp.float32:
            # v5e: bf16 operands, f32 accumulation -> ~3x fewer MXU passes,
            # compute fully hidden under the DMA.
            w_scaled = w_scaled.astype(compute_dtype)
            x = x.astype(compute_dtype)
        o_ref[...] = jnp.dot(w_scaled, x, preferred_element_type=jnp.float32)
    return kernel


@partial(jax.jit, static_argnames=("compute_dtype",))
def mul_conv1x1(x_nchw, scale_nchw, weight_oihw, *, compute_dtype=jnp.float32):
    """x_nchw: (N, Cin, H, W); scale_nchw: (N, Cin, 1, 1); weight: (Cout, Cin, 1, 1)."""
    N, Cin, H, W = x_nchw.shape
    Cout = weight_oihw.shape[0]
    assert scale_nchw.shape == (N, Cin, 1, 1)
    assert weight_oihw.shape == (Cout, Cin, 1, 1)
    assert N == 1, "kernel wrapper assumes batch=1 (matches the reference module)"

    HW = H * W
    # Free row-major reshapes (no data movement):
    x_mat = x_nchw.reshape(Cin, HW)          # (Cin, HW)
    s_row = scale_nchw.reshape(1, Cin)       # (1, Cin)
    w_mat = weight_oihw.reshape(Cout, Cin)   # (Cout, Cin)

    flops = 2 * Cout * Cin * HW + Cout * Cin
    bytes_accessed = 4 * (Cin * HW + Cin + Cout * Cin + Cout * HW)

    # No grid: single kernel invocation, full arrays resident in VMEM, no
    # double-buffering prologue.  DO NOT add tiling/pipelining here -- per-step
    # overhead (~0.35 us) exceeds the entire compute time of this op.
    vmem_spec = pl.BlockSpec(memory_space=pltpu.MemorySpace.VMEM)
    out_mat = pl.pallas_call(
        _make_scaled_conv1x1_kernel(compute_dtype),
        out_shape=jax.ShapeDtypeStruct((Cout, HW), jnp.float32),
        in_specs=[vmem_spec, vmem_spec, vmem_spec],
        out_specs=vmem_spec,
        cost_estimate=pl.CostEstimate(flops=flops, transcendentals=0,
                                      bytes_accessed=bytes_accessed),
    )(x_mat, s_row, w_mat)

    # (Cout, HW) -> (N, Cout, H, W): also a free reshape.
    return out_mat.reshape(N, Cout, H, W)


def _default_compute_dtype():
    """bf16 matmul operands on v5e-class chips (slow f32 MXU path), f32 elsewhere."""
    try:
        kind = jax.devices()[0].device_kind.lower()
    except Exception:
        return jnp.float32
    if ("v5e" in kind) or ("v5 lite" in kind) or ("v5lite" in kind):
        return jnp.bfloat16
    return jnp.float32


if __name__ == "__main__":
    key = jax.random.PRNGKey(0)
    k1, k2, k3 = jax.random.split(key, 3)

    # Shapes implied by the module spec.
    N, Cin, H, W, Cout = 1, 576, 14, 14, 136

    x196 = jax.random.normal(k1, (N, Cin, H, W), dtype=jnp.float32)
    x201 = jax.random.normal(k2, (N, Cin, 1, 1), dtype=jnp.float32)
    # Deterministic Conv2d weight init (kaiming-uniform-like, bound = 1/sqrt(fan_in))
    fan_in = Cin * 1 * 1
    bound = 1.0 / (fan_in ** 0.5)
    conv_w = jax.random.uniform(k3, (Cout, Cin, 1, 1), dtype=jnp.float32,
                                minval=-bound, maxval=bound)

    compute_dtype = _default_compute_dtype()
    out = mul_conv1x1(x196, x201, conv_w, compute_dtype=compute_dtype)
    out = jax.block_until_ready(out)

    # Pure-JAX reference (same math as the PyTorch module, NCHW, f32).
    ref = jnp.einsum("oc,nchw->nohw", conv_w.reshape(Cout, Cin), x196 * x201)
    assert out.shape == (N, Cout, H, W), out.shape
    if compute_dtype == jnp.float32:
        atol = rtol = 1e-3
    else:  # bf16 operands (v5e fast path) -- f32 accumulation, looser check
        atol = rtol = 2e-2
    max_err = float(jnp.max(jnp.abs(out - ref)))
    assert jnp.allclose(out, ref, atol=atol, rtol=rtol), max_err

    print("KERNEL_OK")
</pallas_src>

<mosaic_0001>
module attributes {stable_mosaic.version = 11 : i64} {
  func.func @kernel(%arg0: memref<576x196xf32, #tpu.memory_space<vmem>>, %arg1: memref<1x576xf32, #tpu.memory_space<vmem>>, %arg2: memref<136x576xf32, #tpu.memory_space<vmem>>, %arg3: memref<136x196xf32, #tpu.memory_space<vmem>>) attributes {dimension_semantics = [], scalar_prefetch = 0 : i64, scratch_operands = 0 : i64, tpu.core_type = #tpu.core_type<tc>} {
    %c0 = arith.constant 0 : index
    %c0_0 = arith.constant 0 : index
    %0 = vector.load %arg2[%c0, %c0_0] : memref<136x576xf32, #tpu.memory_space<vmem>>, vector<136x576xf32>
    %c0_1 = arith.constant 0 : index
    %c0_2 = arith.constant 0 : index
    %1 = vector.load %arg1[%c0_1, %c0_2] : memref<1x576xf32, #tpu.memory_space<vmem>>, vector<1x576xf32>
    %2 = vector.broadcast %1 : vector<1x576xf32> to vector<136x576xf32>
    %3 = arith.mulf %0, %2 : vector<136x576xf32>
    %c0_3 = arith.constant 0 : index
    %c0_4 = arith.constant 0 : index
    %4 = vector.load %arg0[%c0_3, %c0_4] : memref<576x196xf32, #tpu.memory_space<vmem>>, vector<576x196xf32>
    %cst = arith.constant dense<0.000000e+00> : vector<136x196xf32>
    %5 = tpu.matmul %3, %4, %cst {dimension_numbers = #tpu.dot_dimension_numbers<[1], [0], [0], [1], [0, 0, 1, 1], [], []>} : vector<136x576xf32>, vector<576x196xf32>, vector<136x196xf32> -> vector<136x196xf32>
    %c0_5 = arith.constant 0 : index
    %c0_6 = arith.constant 0 : index
    %6 = vector.load %arg3[%c0_5, %c0_6] : memref<136x196xf32, #tpu.memory_space<vmem>>, vector<136x196xf32>
    tpu.vector_store %arg3[%c0_5, %c0_6], %5 {strides = array<i32>} : memref<136x196xf32, #tpu.memory_space<vmem>>, vector<136x196xf32>,
    return
  }
}

</mosaic_0001>

<llo_original>
// kernel: mul_conv1x1.1
$region0: #{mul_conv1x1.1}
  #allocation0 [shape = 'u32[]', space=smem, size = 0x4, offset = 0x4, fixed_abs, tag = 'smem constant byte address 0x4 - core index']
  #allocation1 [shape = 'u32[144,128]{1,0:T(1,128)}', space=vmem, size = 0x12000, scoped, tag = 'internal scratch']
  %s0 = inlined_call_operand.vmem [shape: f32[576,196], index: 0, kind: input, shape index: {}]
  %s1 = inlined_call_operand.vmem [shape: f32[1,576], index: 1, kind: input, shape index: {}]
  %s2 = inlined_call_operand.vmem [shape: f32[136,576], index: 2, kind: input, shape index: {}]
  %s3 = inlined_call_operand.vmem [shape: f32[136,196], index: 3, kind: output, shape index: {}]
  %s4 = sld [smem:[#allocation0]]
  $region22: #{mul_conv1x1.1} parent=0
    _
  %s6 = ssub.s32 1, %s4
  %s7 = scalar_select 0, %s6, %s4
  // Predicated region
  $region2: #{mul_conv1x1.1} parent=0 // pred_check
    _
  $region3: #{mul_conv1x1.1} parent=0 // pred_check_branch
    %9 = sbr.rel (0) target = $region5
  $region4: #{mul_conv1x1.1} parent=0 // pred_region
    _
  $region5: #{mul_conv1x1.1} parent=0 // pred_fallthru
    _
  // Predicated region
  $region6: #{mul_conv1x1.1} parent=0 // pred_check
    _
  $region7: #{mul_conv1x1.1} parent=0 // pred_check_branch
    %11 = sbr.rel (0) target = $region9
  $region8: #{mul_conv1x1.1} parent=0 // pred_region
    _
  $region9: #{mul_conv1x1.1} parent=0 // pred_fallthru
    _
  // Predicated region
  $region10: #{mul_conv1x1.1} parent=0 // pred_check
    _
  $region11: #{mul_conv1x1.1} parent=0 // pred_check_branch
    %13 = sbr.rel (0) target = $region13
  $region12: #{mul_conv1x1.1} parent=0 // pred_region
    _
  $region13: #{mul_conv1x1.1} parent=0 // pred_fallthru
    _
  %v14 = vld [vmem:[%s2] sm:$0xff]
  %v15 = vld [vmem:[%s2 + $0x8] sm:$0xff]
  %v16 = vld [vmem:[%s2 + $0x10] sm:$0xff]
  %v17 = vld [vmem:[%s2 + $0x18] sm:$0xff]
  %v18 = vld [vmem:[%s2 + $0x20] sm:$0xff]
  %v19 = vld [vmem:[%s2 + $0x28] sm:$0xff]
  %v20 = vld [vmem:[%s2 + $0x30] sm:$0xff]
  %v21 = vld [vmem:[%s2 + $0x38] sm:$0xff]
  %v22 = vld [vmem:[%s2 + $0x40] sm:$0xff]
  %v23 = vld [vmem:[%s2 + $0x48] sm:$0xff]
  %v24 = vld [vmem:[%s2 + $0x50] sm:$0xff]
  %v25 = vld [vmem:[%s2 + $0x58] sm:$0xff]
  %v26 = vld [vmem:[%s2 + $0x60] sm:$0xff]
  %v27 = vld [vmem:[%s2 + $0x68] sm:$0xff]
  %v28 = vld [vmem:[%s2 + $0x70] sm:$0xff]
  %v29 = vld [vmem:[%s2 + $0x78] sm:$0xff]
  %v30 = vld [vmem:[%s2 + $0x80] sm:$0xff]
  %v31 = vld [vmem:[%s2 + $0x88] sm:$0xff]
  %v32 = vld [vmem:[%s2 + $0x90] sm:$0xff]
  %v33 = vld [vmem:[%s2 + $0x98] sm:$0xff]
  %v34 = vld [vmem:[%s2 + $0xa0] sm:$0xff]
  %v35 = vld [vmem:[%s2 + $0xa8] sm:$0xff]
  %v36 = vld [vmem:[%s2 + $0xb0] sm:$0xff]
  %v37 = vld [vmem:[%s2 + $0xb8] sm:$0xff]
  %v38 = vld [vmem:[%s2 + $0xc0] sm:$0xff]
  %v39 = vld [vmem:[%s2 + $0xc8] sm:$0xff]
  %v40 = vld [vmem:[%s2 + $0xd0] sm:$0xff]
  %v41 = vld [vmem:[%s2 + $0xd8] sm:$0xff]
  %v42 = vld [vmem:[%s2 + $0xe0] sm:$0xff]
  %v43 = vld [vmem:[%s2 + $0xe8] sm:$0xff]
  %v44 = vld [vmem:[%s2 + $0xf0] sm:$0xff]
  %v45 = vld [vmem:[%s2 + $0xf8] sm:$0xff]
  %v46 = vld [vmem:[%s2 + $0x100] sm:$0xff]
  %v47 = vld [vmem:[%s2 + $0x108] sm:$0xff]
  %v48 = vld [vmem:[%s2 + $0x110] sm:$0xff]
  %v49 = vld [vmem:[%s2 + $0x118] sm:$0xff]
  %v50 = vld [vmem:[%s2 + $0x120] sm:$0xff]
  %v51 = vld [vmem:[%s2 + $0x128] sm:$0xff]
  %v52 = vld [vmem:[%s2 + $0x130] sm:$0xff]
  %v53 = vld [vmem:[%s2 + $0x138] sm:$0xff]
  %v54 = vld [vmem:[%s2 + $0x140] sm:$0xff]
  %v55 = vld [vmem:[%s2 + $0x148] sm:$0xff]
  %v56 = vld [vmem:[%s2 + $0x150] sm:$0xff]
  %v57 = vld [vmem:[%s2 + $0x158] sm:$0xff]
  %v58 = vld [vmem:[%s2 + $0x160] sm:$0xff]
  %v59 = vld [vmem:[%s2 + $0x168] sm:$0xff]
  %v60 = vld [vmem:[%s2 + $0x170] sm:$0xff]
  %v61 = vld [vmem:[%s2 + $0x178] sm:$0xff]
  %v62 = vld [vmem:[%s2 + $0x180] sm:$0xff]
  %v63 = vld [vmem:[%s2 + $0x188] sm:$0xff]
  %v64 = vld [vmem:[%s2 + $0x190] sm:$0xff]
  %v65 = vld [vmem:[%s2 + $0x198] sm:$0xff]
  %v66 = vld [vmem:[%s2 + $0x1a0] sm:$0xff]
  %v67 = vld [vmem:[%s2 + $0x1a8] sm:$0xff]
  %v68 = vld [vmem:[%s2 + $0x1b0] sm:$0xff]
  %v69 = vld [vmem:[%s2 + $0x1b8] sm:$0xff]
  %v70 = vld [vmem:[%s2 + $0x1c0] sm:$0xff]
  %v71 = vld [vmem:[%s2 + $0x1c8] sm:$0xff]
  %v72 = vld [vmem:[%s2 + $0x1d0] sm:$0xff]
  %v73 = vld [vmem:[%s2 + $0x1d8] sm:$0xff]
  %v74 = vld [vmem:[%s2 + $0x1e0] sm:$0xff]
  %v75 = vld [vmem:[%s2 + $0x1e8] sm:$0xff]
  %v76 = vld [vmem:[%s2 + $0x1f0] sm:$0xff]
  %v77 = vld [vmem:[%s2 + $0x1f8] sm:$0xff]
  %v78 = vld [vmem:[%s2 + $0x200] sm:$0xff]
  %v79 = vld [vmem:[%s2 + $0x208] sm:$0xff]
  %v80 = vld [vmem:[%s2 + $0x210] sm:$0xff]
  %v81 = vld [vmem:[%s2 + $0x218] sm:$0xff]
  %v82 = vld [vmem:[%s2 + $0x220] sm:$0xff]
  %v83 = vld [vmem:[%s2 + $0x228] sm:$0xff]
  %v84 = vld [vmem:[%s2 + $0x230] sm:$0xff]
  %v85 = vld [vmem:[%s2 + $0x238] sm:$0xff]
  %v86 = vld [vmem:[%s2 + $0x240] sm:$0xff]
  %v87 = vld [vmem:[%s2 + $0x248] sm:$0xff]
  %v88 = vld [vmem:[%s2 + $0x250] sm:$0xff]
  %v89 = vld [vmem:[%s2 + $0x258] sm:$0xff]
  %v90 = vld [vmem:[%s2 + $0x260] sm:$0xff]
  %v91 = vld [vmem:[%s2 + $0x268] sm:$0xff]
  %v92 = vld [vmem:[%s2 + $0x270] sm:$0xff]
  %v93 = vld [vmem:[%s2 + $0x278] sm:$0xff]
  %v94 = vld [vmem:[%s2 + $0x280] sm:$0xff]
  %v95 = vld [vmem:[%s2 + $0x288] sm:$0xff]
  %v96 = vld [vmem:[%s2 + $0x290] sm:$0xff]
  %v97 = vld [vmem:[%s2 + $0x298] sm:$0xff]
  %v98 = vld [vmem:[%s2 + $0x2a0] sm:$0xff]
  %v99 = vld [vmem:[%s1] sm:$0x1f]
  %v101 = vlaneseq
  %v102 = vshrl.u32 %v101, 7
  %v103 = vsub.s32 0, %v102
  %v104 = vrot.slane %v99, %v103
  %v105 = vlaneseq
  %v106 = vshrl.u32 %v105, 7
  %v107 = vsub.s32 1, %v106
  %v108 = vrot.slane %v99, %v107
  %v109 = vlaneseq
  %v110 = vshrl.u32 %v109, 7
  %v111 = vsub.s32 2, %v110
  %v112 = vrot.slane %v99, %v111
  %v113 = vlaneseq
  %v114 = vshrl.u32 %v113, 7
  %v115 = vsub.s32 3, %v114
  %v116 = vrot.slane %v99, %v115
  %v117 = vlaneseq
  %v118 = vshrl.u32 %v117, 7
  %v119 = vsub.s32 4, %v118
  %v120 = vrot.slane %v99, %v119
  %v126 = vmul.f32 %v14, %v104
  %v127 = vmul.f32 %v15, %v108
  %v128 = vmul.f32 %v16, %v112
  %v129 = vmul.f32 %v17, %v116
  %v130 = vmul.f32 %v18, %v120
  %v131 = vmul.f32 %v19, %v104
  %v132 = vmul.f32 %v20, %v108
  %v133 = vmul.f32 %v21, %v112
  %v134 = vmul.f32 %v22, %v116
  %v135 = vmul.f32 %v23, %v120
  %v136 = vmul.f32 %v24, %v104
  %v137 = vmul.f32 %v25, %v108
  %v138 = vmul.f32 %v26, %v112
  %v139 = vmul.f32 %v27, %v116
  %v140 = vmul.f32 %v28, %v120
  %v141 = vmul.f32 %v29, %v104
  %v142 = vmul.f32 %v30, %v108
  %v143 = vmul.f32 %v31, %v112
  %v144 = vmul.f32 %v32, %v116
  %v145 = vmul.f32 %v33, %v120
  %v146 = vmul.f32 %v34, %v104
  %v147 = vmul.f32 %v35, %v108
  %v148 = vmul.f32 %v36, %v112
  %v149 = vmul.f32 %v37, %v116
  %v150 = vmul.f32 %v38, %v120
  %v151 = vmul.f32 %v39, %v104
  %v152 = vmul.f32 %v40, %v108
  %v153 = vmul.f32 %v41, %v112
  %v154 = vmul.f32 %v42, %v116
  %v155 = vmul.f32 %v43, %v120
  %v156 = vmul.f32 %v44, %v104
  %v157 = vmul.f32 %v45, %v108
  %v158 = vmul.f32 %v46, %v112
  %v159 = vmul.f32 %v47, %v116
  %v160 = vmul.f32 %v48, %v120
  %v161 = vmul.f32 %v49, %v104
  %v162 = vmul.f32 %v50, %v108
  %v163 = vmul.f32 %v51, %v112
  %v164 = vmul.f32 %v52, %v116
  %v165 = vmul.f32 %v53, %v120
  %v166 = vmul.f32 %v54, %v104
  %v167 = vmul.f32 %v55, %v108
  %v168 = vmul.f32 %v56, %v112
  %v169 = vmul.f32 %v57, %v116
  %v170 = vmul.f32 %v58, %v120
  %v171 = vmul.f32 %v59, %v104
  %v172 = vmul.f32 %v60, %v108
  %v173 = vmul.f32 %v61, %v112
  %v174 = vmul.f32 %v62, %v116
  %v175 = vmul.f32 %v63, %v120
  %v176 = vmul.f32 %v64, %v104
  %v177 = vmul.f32 %v65, %v108
  %v178 = vmul.f32 %v66, %v112
  %v179 = vmul.f32 %v67, %v116
  %v180 = vmul.f32 %v68, %v120
  %v181 = vmul.f32 %v69, %v104
  %v182 = vmul.f32 %v70, %v108
  %v183 = vmul.f32 %v71, %v112
  %v184 = vmul.f32 %v72, %v116
  %v185 = vmul.f32 %v73, %v120
  %v186 = vmul.f32 %v74, %v104
  %v187 = vmul.f32 %v75, %v108
  %v188 = vmul.f32 %v76, %v112
  %v189 = vmul.f32 %v77, %v116
  %v190 = vmul.f32 %v78, %v120
  %v191 = vmul.f32 %v79, %v104
  %v192 = vmul.f32 %v80, %v108
  %v193 = vmul.f32 %v81, %v112
  %v194 = vmul.f32 %v82, %v116
  %v195 = vmul.f32 %v83, %v120
  %v196 = vmul.f32 %v84, %v104
  %v197 = vmul.f32 %v85, %v108
  %v198 = vmul.f32 %v86, %v112
  %v199 = vmul.f32 %v87, %v116
  %v200 = vmul.f32 %v88, %v120
  %v201 = vmul.f32 %v89, %v104
  %v202 = vmul.f32 %v90, %v108
  %v203 = vmul.f32 %v91, %v112
  %v204 = vmul.f32 %v92, %v116
  %v205 = vmul.f32 %v93, %v120
  %v206 = vmul.f32 %v94, %v104
  %v207 = vmul.f32 %v95, %v108
  %v208 = vmul.f32 %v96, %v112
  %v209 = vmul.f32 %v97, %v116
  %v210 = vmul.f32 %v98, %v120
  %v211 = vld [vmem:[%s0] sm:$0xff]
  %v212 = vld [vmem:[%s0 + $0x8] sm:$0xff]
  %v213 = vld [vmem:[%s0 + $0x10] sm:$0xff]
  %v214 = vld [vmem:[%s0 + $0x18] sm:$0xff]
  %v215 = vld [vmem:[%s0 + $0x20] sm:$0xff]
  %v216 = vld [vmem:[%s0 + $0x28] sm:$0xff]
  %v217 = vld [vmem:[%s0 + $0x30] sm:$0xff]
  %v218 = vld [vmem:[%s0 + $0x38] sm:$0xff]
  %v219 = vld [vmem:[%s0 + $0x40] sm:$0xff]
  %v220 = vld [vmem:[%s0 + $0x48] sm:$0xff]
  %v221 = vld [vmem:[%s0 + $0x50] sm:$0xff]
  %v222 = vld [vmem:[%s0 + $0x58] sm:$0xff]
  %v223 = vld [vmem:[%s0 + $0x60] sm:$0xff]
  %v224 = vld [vmem:[%s0 + $0x68] sm:$0xff]
  %v225 = vld [vmem:[%s0 + $0x70] sm:$0xff]
  %v226 = vld [vmem:[%s0 + $0x78] sm:$0xff]
  %v227 = vld [vmem:[%s0 + $0x80] sm:$0xff]
  %v228 = vld [vmem:[%s0 + $0x88] sm:$0xff]
  %v229 = vld [vmem:[%s0 + $0x90] sm:$0xff]
  %v230 = vld [vmem:[%s0 + $0x98] sm:$0xff]
  %v231 = vld [vmem:[%s0 + $0xa0] sm:$0xff]
  %v232 = vld [vmem:[%s0 + $0xa8] sm:$0xff]
  %v233 = vld [vmem:[%s0 + $0xb0] sm:$0xff]
  %v234 = vld [vmem:[%s0 + $0xb8] sm:$0xff]
  %v235 = vld [vmem:[%s0 + $0xc0] sm:$0xff]
  %v236 = vld [vmem:[%s0 + $0xc8] sm:$0xff]
  %v237 = vld [vmem:[%s0 + $0xd0] sm:$0xff]
  %v238 = vld [vmem:[%s0 + $0xd8] sm:$0xff]
  %v239 = vld [vmem:[%s0 + $0xe0] sm:$0xff]
  %v240 = vld [vmem:[%s0 + $0xe8] sm:$0xff]
  %v241 = vld [vmem:[%s0 + $0xf0] sm:$0xff]
  %v242 = vld [vmem:[%s0 + $0xf8] sm:$0xff]
  %v243 = vld [vmem:[%s0 + $0x100] sm:$0xff]
  %v244 = vld [vmem:[%s0 + $0x108] sm:$0xff]
  %v245 = vld [vmem:[%s0 + $0x110] sm:$0xff]
  %v246 = vld [vmem:[%s0 + $0x118] sm:$0xff]
  %v247 = vld [vmem:[%s0 + $0x120] sm:$0xff]
  %v248 = vld [vmem:[%s0 + $0x128] sm:$0xff]
  %v249 = vld [vmem:[%s0 + $0x130] sm:$0xff]
  %v250 = vld [vmem:[%s0 + $0x138] sm:$0xff]
  %v251 = vld [vmem:[%s0 + $0x140] sm:$0xff]
  %v252 = vld [vmem:[%s0 + $0x148] sm:$0xff]
  %v253 = vld [vmem:[%s0 + $0x150] sm:$0xff]
  %v254 = vld [vmem:[%s0 + $0x158] sm:$0xff]
  %v255 = vld [vmem:[%s0 + $0x160] sm:$0xff]
  %v256 = vld [vmem:[%s0 + $0x168] sm:$0xff]
  %v257 = vld [vmem:[%s0 + $0x170] sm:$0xff]
  %v258 = vld [vmem:[%s0 + $0x178] sm:$0xff]
  %v259 = vld [vmem:[%s0 + $0x180] sm:$0xff]
  %v260 = vld [vmem:[%s0 + $0x188] sm:$0xff]
  %v261 = vld [vmem:[%s0 + $0x190] sm:$0xff]
  %v262 = vld [vmem:[%s0 + $0x198] sm:$0xff]
  %v263 = vld [vmem:[%s0 + $0x1a0] sm:$0xff]
  %v264 = vld [vmem:[%s0 + $0x1a8] sm:$0xff]
  %v265 = vld [vmem:[%s0 + $0x1b0] sm:$0xff]
  %v266 = vld [vmem:[%s0 + $0x1b8] sm:$0xff]
  %v267 = vld [vmem:[%s0 + $0x1c0] sm:$0xff]
  %v268 = vld [vmem:[%s0 + $0x1c8] sm:$0xff]
  %v269 = vld [vmem:[%s0 + $0x1d0] sm:$0xff]
  %v270 = vld [vmem:[%s0 + $0x1d8] sm:$0xff]
  %v271 = vld [vmem:[%s0 + $0x1e0] sm:$0xff]
  %v272 = vld [vmem:[%s0 + $0x1e8] sm:$0xff]
  %v273 = vld [vmem:[%s0 + $0x1f0] sm:$0xff]
  %v274 = vld [vmem:[%s0 + $0x1f8] sm:$0xff]
  %v275 = vld [vmem:[%s0 + $0x200] sm:$0xff]
  %v276 = vld [vmem:[%s0 + $0x208] sm:$0xff]
  %v277 = vld [vmem:[%s0 + $0x210] sm:$0xff]
  %v278 = vld [vmem:[%s0 + $0x218] sm:$0xff]
  %v279 = vld [vmem:[%s0 + $0x220] sm:$0xff]
  %v280 = vld [vmem:[%s0 + $0x228] sm:$0xff]
  %v281 = vld [vmem:[%s0 + $0x230] sm:$0xff]
  %v282 = vld [vmem:[%s0 + $0x238] sm:$0xff]
  %v283 = vld [vmem:[%s0 + $0x240] sm:$0xff]
  %v284 = vld [vmem:[%s0 + $0x248] sm:$0xff]
  %v285 = vld [vmem:[%s0 + $0x250] sm:$0xff]
  %v286 = vld [vmem:[%s0 + $0x258] sm:$0xff]
  %v287 = vld [vmem:[%s0 + $0x260] sm:$0xff]
  %v288 = vld [vmem:[%s0 + $0x268] sm:$0xff]
  %v289 = vld [vmem:[%s0 + $0x270] sm:$0xff]
  %v290 = vld [vmem:[%s0 + $0x278] sm:$0xff]
  %v291 = vld [vmem:[%s0 + $0x280] sm:$0xff]
  %v292 = vld [vmem:[%s0 + $0x288] sm:$0xff]
  %v293 = vld [vmem:[%s0 + $0x290] sm:$0xff]
  %v294 = vld [vmem:[%s0 + $0x298] sm:$0xff]
  %v295 = vld [vmem:[%s0 + $0x2a0] sm:$0xff]
  %v296 = vld [vmem:[%s0 + $0x2a8] sm:$0xff]
  %v297 = vld [vmem:[%s0 + $0x2b0] sm:$0xff]
  %v298 = vld [vmem:[%s0 + $0x2b8] sm:$0xff]
  %v299 = vld [vmem:[%s0 + $0x2c0] sm:$0xff]
  %v300 = vld [vmem:[%s0 + $0x2c8] sm:$0xff]
  %v301 = vld [vmem:[%s0 + $0x2d0] sm:$0xff]
  %v302 = vld [vmem:[%s0 + $0x2d8] sm:$0xff]
  %v303 = vld [vmem:[%s0 + $0x2e0] sm:$0xff]
  %v304 = vld [vmem:[%s0 + $0x2e8] sm:$0xff]
  %v305 = vld [vmem:[%s0 + $0x2f0] sm:$0xff]
  %v306 = vld [vmem:[%s0 + $0x2f8] sm:$0xff]
  %v307 = vld [vmem:[%s0 + $0x300] sm:$0xff]
  %v308 = vld [vmem:[%s0 + $0x308] sm:$0xff]
  %v309 = vld [vmem:[%s0 + $0x310] sm:$0xff]
  %v310 = vld [vmem:[%s0 + $0x318] sm:$0xff]
  %v311 = vld [vmem:[%s0 + $0x320] sm:$0xff]
  %v312 = vld [vmem:[%s0 + $0x328] sm:$0xff]
  %v313 = vld [vmem:[%s0 + $0x330] sm:$0xff]
  %v314 = vld [vmem:[%s0 + $0x338] sm:$0xff]
  %v315 = vld [vmem:[%s0 + $0x340] sm:$0xff]
  %v316 = vld [vmem:[%s0 + $0x348] sm:$0xff]
  %v317 = vld [vmem:[%s0 + $0x350] sm:$0xff]
  %v318 = vld [vmem:[%s0 + $0x358] sm:$0xff]
  %v319 = vld [vmem:[%s0 + $0x360] sm:$0xff]
  %v320 = vld [vmem:[%s0 + $0x368] sm:$0xff]
  %v321 = vld [vmem:[%s0 + $0x370] sm:$0xff]
  %v322 = vld [vmem:[%s0 + $0x378] sm:$0xff]
  %v323 = vld [vmem:[%s0 + $0x380] sm:$0xff]
  %v324 = vld [vmem:[%s0 + $0x388] sm:$0xff]
  %v325 = vld [vmem:[%s0 + $0x390] sm:$0xff]
  %v326 = vld [vmem:[%s0 + $0x398] sm:$0xff]
  %v327 = vld [vmem:[%s0 + $0x3a0] sm:$0xff]
  %v328 = vld [vmem:[%s0 + $0x3a8] sm:$0xff]
  %v329 = vld [vmem:[%s0 + $0x3b0] sm:$0xff]
  %v330 = vld [vmem:[%s0 + $0x3b8] sm:$0xff]
  %v331 = vld [vmem:[%s0 + $0x3c0] sm:$0xff]
  %v332 = vld [vmem:[%s0 + $0x3c8] sm:$0xff]
  %v333 = vld [vmem:[%s0 + $0x3d0] sm:$0xff]
  %v334 = vld [vmem:[%s0 + $0x3d8] sm:$0xff]
  %v335 = vld [vmem:[%s0 + $0x3e0] sm:$0xff]
  %v336 = vld [vmem:[%s0 + $0x3e8] sm:$0xff]
  %v337 = vld [vmem:[%s0 + $0x3f0] sm:$0xff]
  %v338 = vld [vmem:[%s0 + $0x3f8] sm:$0xff]
  %v339 = vld [vmem:[%s0 + $0x400] sm:$0xff]
  %v340 = vld [vmem:[%s0 + $0x408] sm:$0xff]
  %v341 = vld [vmem:[%s0 + $0x410] sm:$0xff]
  %v342 = vld [vmem:[%s0 + $0x418] sm:$0xff]
  %v343 = vld [vmem:[%s0 + $0x420] sm:$0xff]
  %v344 = vld [vmem:[%s0 + $0x428] sm:$0xff]
  %v345 = vld [vmem:[%s0 + $0x430] sm:$0xff]
  %v346 = vld [vmem:[%s0 + $0x438] sm:$0xff]
  %v347 = vld [vmem:[%s0 + $0x440] sm:$0xff]
  %v348 = vld [vmem:[%s0 + $0x448] sm:$0xff]
  %v349 = vld [vmem:[%s0 + $0x450] sm:$0xff]
  %v350 = vld [vmem:[%s0 + $0x458] sm:$0xff]
  %v351 = vld [vmem:[%s0 + $0x460] sm:$0xff]
  %v352 = vld [vmem:[%s0 + $0x468] sm:$0xff]
  %v353 = vld [vmem:[%s0 + $0x470] sm:$0xff]
  %v354 = vld [vmem:[%s0 + $0x478] sm:$0xff]
  %vm355 = vcmask 523264
  %v357 = vsel %vm355, %v130, 0
  %v360 = vsel %vm355, %v135, 0
  %v363 = vsel %vm355, %v140, 0
  %v366 = vsel %vm355, %v145, 0
  %v369 = vsel %vm355, %v150, 0
  %v372 = vsel %vm355, %v155, 0
  %v375 = vsel %vm355, %v160, 0
  %v378 = vsel %vm355, %v165, 0
  %v381 = vsel %vm355, %v170, 0
  %v384 = vsel %vm355, %v175, 0
  %v387 = vsel %vm355, %v180, 0
  %v390 = vsel %vm355, %v185, 0
  %v393 = vsel %vm355, %v190, 0
  %v396 = vsel %vm355, %v195, 0
  %v399 = vsel %vm355, %v200, 0
  %v402 = vsel %vm355, %v205, 0
  %v405 = vsel %vm355, %v210, 0
  %407 = vmatprep.subr.mxu0 %v242
  %408 = vmatpush1.msra.mxu0 %v241
  %409 = vmatprep.subr.mxu0 %v240
  %410 = vmatpush1.msra.mxu0 %v239
  %411 = vmatprep.subr.mxu0 %v238
  %412 = vmatpush1.msra.mxu0 %v237
  %413 = vmatprep.subr.mxu0 %v236
  %414 = vmatpush1.msra.mxu0 %v235
  %415 = vmatprep.subr.mxu0 %v234
  %416 = vmatpush1.msra.mxu0 %v233
  %417 = vmatprep.subr.mxu0 %v232
  %418 = vmatpush1.msra.mxu0 %v231
  %419 = vmatprep.subr.mxu0 %v230
  %420 = vmatpush1.msra.mxu0 %v229
  %421 = vmatprep.subr.mxu0 %v228
  %422 = vmatpush1.msra.mxu0 %v227
  %423 = vmatprep.subr.mxu0 %v226
  %424 = vmatpush1.msra.mxu0 %v225
  %425 = vmatprep.subr.mxu0 %v224
  %426 = vmatpush1.msra.mxu0 %v223
  %427 = vmatprep.subr.mxu0 %v222
  %428 = vmatpush1.msra.mxu0 %v221
  %429 = vmatprep.subr.mxu0 %v220
  %430 = vmatpush1.msra.mxu0 %v219
  %431 = vmatprep.subr.mxu0 %v218
  %432 = vmatpush1.msra.mxu0 %v217
  %433 = vmatprep.subr.mxu0 %v216
  %434 = vmatpush1.msra.mxu0 %v215
  %435 = vmatprep.subr.mxu0 %v214
  %436 = vmatpush1.msra.mxu0 %v213
  %437 = vmatprep.subr.mxu0 %v212
  %438 = vmatpush1.msra.mxu0 %v211
  %439 = vmatprep.subr.mxu0 %v274
  %440 = vmatpush2.msra.mxu0 %v273
  %441 = vmatprep.subr.mxu0 %v272
  %442 = vmatpush2.msra.mxu0 %v271
  %443 = vmatprep.subr.mxu0 %v270
  %444 = vmatpush2.msra.mxu0 %v269
  %445 = vmatprep.subr.mxu0 %v268
  %446 = vmatpush2.msra.mxu0 %v267
  %447 = vmatprep.subr.mxu0 %v266
  %448 = vmatpush2.msra.mxu0 %v265
  %449 = vmatprep.subr.mxu0 %v264
  %450 = vmatpush2.msra.mxu0 %v263
  %451 = vmatprep.subr.mxu0 %v262
  %452 = vmatpush2.msra.mxu0 %v261
  %453 = vmatprep.subr.mxu0 %v260
  %454 = vmatpush2.msra.mxu0 %v259
  %455 = vmatprep.subr.mxu0 %v258
  %456 = vmatpush2.msra.mxu0 %v257
  %457 = vmatprep.subr.mxu0 %v256
  %458 = vmatpush2.msra.mxu0 %v255
  %459 = vmatprep.subr.mxu0 %v254
  %460 = vmatpush2.msra.mxu0 %v253
  %461 = vmatprep.subr.mxu0 %v252
  %462 = vmatpush2.msra.mxu0 %v251
  %463 = vmatprep.subr.mxu0 %v250
  %464 = vmatpush2.msra.mxu0 %v249
  %465 = vmatprep.subr.mxu0 %v248
  %466 = vmatpush2.msra.mxu0 %v247
  %467 = vmatprep.subr.mxu0 %v246
  %468 = vmatpush2.msra.mxu0 %v245
  %469 = vmatprep.subr.mxu0 %v244
  %470 = vmatpush2.msra.mxu0 %v243
  %471 = vmatprep.mubr.f32.mxu0 %v127
  %472 = vmatmul.mubr.f32.gmra.mxu0 %v126
  %v473 = vpop.f32.mrf.mxu0
  %v474 = vadd.f32 0.0, %v473
  %v475 = vpop.f32.mrf.mxu0
  %v476 = vadd.f32 0.0, %v475
  %477 = vmatprep.mubr.f32.mxu0 %v132
  %478 = vmatmul.mubr.f32.gmra.mxu0 %v131
  %v479 = vpop.f32.mrf.mxu0
  %v480 = vadd.f32 0.0, %v479
  %v481 = vpop.f32.mrf.mxu0
  %v482 = vadd.f32 0.0, %v481
  %483 = vmatprep.mubr.f32.mxu0 %v137
  %484 = vmatmul.mubr.f32.gmra.mxu0 %v136
  %v485 = vpop.f32.mrf.mxu0
  %v486 = vadd.f32 0.0, %v485
  %v487 = vpop.f32.mrf.mxu0
  %v488 = vadd.f32 0.0, %v487
  %489 = vmatprep.mubr.f32.mxu0 %v142
  %490 = vmatmul.mubr.f32.gmra.mxu0 %v141
  %v491 = vpop.f32.mrf.mxu0
  %v492 = vadd.f32 0.0, %v491
  %v493 = vpop.f32.mrf.mxu0
  %v494 = vadd.f32 0.0, %v493
  %495 = vmatprep.mubr.f32.mxu0 %v147
  %496 = vmatmul.mubr.f32.gmra.mxu0 %v146
  %v497 = vpop.f32.mrf.mxu0
  %v498 = vadd.f32 0.0, %v497
  %v499 = vpop.f32.mrf.mxu0
  %v500 = vadd.f32 0.0, %v499
  %501 = vmatprep.mubr.f32.mxu0 %v152
  %502 = vmatmul.mubr.f32.gmra.mxu0 %v151
  %v503 = vpop.f32.mrf.mxu0
  %v504 = vadd.f32 0.0, %v503
  %v505 = vpop.f32.mrf.mxu0
  %v506 = vadd.f32 0.0, %v505
  %507 = vmatprep.mubr.f32.mxu0 %v157
  %508 = vmatmul.mubr.f32.gmra.mxu0 %v156
  %v509 = vpop.f32.mrf.mxu0
  %v510 = vadd.f32 0.0, %v509
  %v511 = vpop.f32.mrf.mxu0
  %v512 = vadd.f32 0.0, %v511
  %513 = vmatprep.mubr.f32.mxu0 %v162
  %514 = vmatmul.mubr.f32.gmra.mxu0 %v161
  %v515 = vpop.f32.mrf.mxu0
  %v516 = vadd.f32 0.0, %v515
  %v517 = vpop.f32.mrf.mxu0
  %v518 = vadd.f32 0.0, %v517
  %519 = vmatprep.mubr.f32.mxu0 %v167
  %520 = vmatmul.mubr.f32.gmra.mxu0 %v166
  %v521 = vpop.f32.mrf.mxu0
  %v522 = vadd.f32 0.0, %v521
  %v523 = vpop.f32.mrf.mxu0
  %v524 = vadd.f32 0.0, %v523
  %525 = vmatprep.mubr.f32.mxu0 %v172
  %526 = vmatmul.mubr.f32.gmra.mxu0 %v171
  %v527 = vpop.f32.mrf.mxu0
  %v528 = vadd.f32 0.0, %v527
  %v529 = vpop.f32.mrf.mxu0
  %v530 = vadd.f32 0.0, %v529
  %531 = vmatprep.mubr.f32.mxu0 %v177
  %532 = vmatmul.mubr.f32.gmra.mxu0 %v176
  %v533 = vpop.f32.mrf.mxu0
  %v534 = vadd.f32 0.0, %v533
  %v535 = vpop.f32.mrf.mxu0
  %v536 = vadd.f32 0.0, %v535
  %537 = vmatprep.mubr.f32.mxu0 %v182
  %538 = vmatmul.mubr.f32.gmra.mxu0 %v181
  %v539 = vpop.f32.mrf.mxu0
  %v540 = vadd.f32 0.0, %v539
  %v541 = vpop.f32.mrf.mxu0
  %v542 = vadd.f32 0.0, %v541
  %543 = vmatprep.mubr.f32.mxu0 %v187
  %544 = vmatmul.mubr.f32.gmra.mxu0 %v186
  %v545 = vpop.f32.mrf.mxu0
  %v546 = vadd.f32 0.0, %v545
  %v547 = vpop.f32.mrf.mxu0
  %v548 = vadd.f32 0.0, %v547
  %549 = vmatprep.mubr.f32.mxu0 %v192
  %550 = vmatmul.mubr.f32.gmra.mxu0 %v191
  %v551 = vpop.f32.mrf.mxu0
  %v552 = vadd.f32 0.0, %v551
  %v553 = vpop.f32.mrf.mxu0
  %v554 = vadd.f32 0.0, %v553
  %555 = vmatprep.mubr.f32.mxu0 %v197
  %556 = vmatmul.mubr.f32.gmra.mxu0 %v196
  %v557 = vpop.f32.mrf.mxu0
  %v558 = vadd.f32 0.0, %v557
  %v559 = vpop.f32.mrf.mxu0
  %v560 = vadd.f32 0.0, %v559
  %561 = vmatprep.mubr.f32.mxu0 %v202
  %562 = vmatmul.mubr.f32.gmra.mxu0 %v201
  %v563 = vpop.f32.mrf.mxu0
  %v564 = vadd.f32 0.0, %v563
  %v565 = vpop.f32.mrf.mxu0
  %v566 = vadd.f32 0.0, %v565
  %567 = vmatprep.mubr.f32.mxu0 %v207
  %568 = vmatmul.mubr.f32.gmra.mxu0 %v206
  %v569 = vpop.f32.mrf.mxu0
  %v570 = vadd.f32 0.0, %v569
  %v571 = vpop.f32.mrf.mxu0
  %v572 = vadd.f32 0.0, %v571
  %573 = vdwg.mxu0
  %574 = vmatprep.subr.mxu0 %v306
  %575 = vmatpush1.msra.mxu0 %v305
  %576 = vmatprep.subr.mxu0 %v304
  %577 = vmatpush1.msra.mxu0 %v303
  %578 = vmatprep.subr.mxu0 %v302
  %579 = vmatpush1.msra.mxu0 %v301
  %580 = vmatprep.subr.mxu0 %v300
  %581 = vmatpush1.msra.mxu0 %v299
  %582 = vmatprep.subr.mxu0 %v298
  %583 = vmatpush1.msra.mxu0 %v297
  %584 = vmatprep.subr.mxu0 %v296
  %585 = vmatpush1.msra.mxu0 %v295
  %586 = vmatprep.subr.mxu0 %v294
  %587 = vmatpush1.msra.mxu0 %v293
  %588 = vmatprep.subr.mxu0 %v292
  %589 = vmatpush1.msra.mxu0 %v291
  %590 = vmatprep.subr.mxu0 %v290
  %591 = vmatpush1.msra.mxu0 %v289
  %592 = vmatprep.subr.mxu0 %v288
  %593 = vmatpush1.msra.mxu0 %v287
  %594 = vmatprep.subr.mxu0 %v286
  %595 = vmatpush1.msra.mxu0 %v285
  %596 = vmatprep.subr.mxu0 %v284
  %597 = vmatpush1.msra.mxu0 %v283
  %598 = vmatprep.subr.mxu0 %v282
  %599 = vmatpush1.msra.mxu0 %v281
  %600 = vmatprep.subr.mxu0 %v280
  %601 = vmatpush1.msra.mxu0 %v279
  %602 = vmatprep.subr.mxu0 %v278
  %603 = vmatpush1.msra.mxu0 %v277
  %604 = vmatprep.subr.mxu0 %v276
  %605 = vmatpush1.msra.mxu0 %v275
  %606 = vmatprep.subr.mxu0 %v338
  %607 = vmatpush2.msra.mxu0 %v337
  %608 = vmatprep.subr.mxu0 %v336
  %609 = vmatpush2.msra.mxu0 %v335
  %610 = vmatprep.subr.mxu0 %v334
  %611 = vmatpush2.msra.mxu0 %v333
  %612 = vmatprep.subr.mxu0 %v332
  %613 = vmatpush2.msra.mxu0 %v331
  %614 = vmatprep.subr.mxu0 %v330
  %615 = vmatpush2.msra.mxu0 %v329
  %616 = vmatprep.subr.mxu0 %v328
  %617 = vmatpush2.msra.mxu0 %v327
  %618 = vmatprep.subr.mxu0 %v326
  %619 = vmatpush2.msra.mxu0 %v325
  %620 = vmatprep.subr.mxu0 %v324
  %621 = vmatpush2.msra.mxu0 %v323
  %622 = vmatprep.subr.mxu0 %v322
  %623 = vmatpush2.msra.mxu0 %v321
  %624 = vmatprep.subr.mxu0 %v320
  %625 = vmatpush2.msra.mxu0 %v319
  %626 = vmatprep.subr.mxu0 %v318
  %627 = vmatpush2.msra.mxu0 %v317
  %628 = vmatprep.subr.mxu0 %v316
  %629 = vmatpush2.msra.mxu0 %v315
  %630 = vmatprep.subr.mxu0 %v314
  %631 = vmatpush2.msra.mxu0 %v313
  %632 = vmatprep.subr.mxu0 %v312
  %633 = vmatpush2.msra.mxu0 %v311
  %634 = vmatprep.subr.mxu0 %v310
  %635 = vmatpush2.msra.mxu0 %v309
  %636 = vmatprep.subr.mxu0 %v308
  %637 = vmatpush2.msra.mxu0 %v307
  %638 = vmatprep.mubr.f32.mxu0 %v129
  %639 = vmatmul.mubr.f32.gmra.mxu0 %v128
  %v640 = vpop.f32.mrf.mxu0
  %v641 = vadd.f32 %v474, %v640
  %v642 = vpop.f32.mrf.mxu0
  %v643 = vadd.f32 %v476, %v642
  %644 = vmatprep.mubr.f32.mxu0 %v134
  %645 = vmatmul.mubr.f32.gmra.mxu0 %v133
  %v646 = vpop.f32.mrf.mxu0
  %v647 = vadd.f32 %v480, %v646
  %v648 = vpop.f32.mrf.mxu0
  %v649 = vadd.f32 %v482, %v648
  %650 = vmatprep.mubr.f32.mxu0 %v139
  %651 = vmatmul.mubr.f32.gmra.mxu0 %v138
  %v652 = vpop.f32.mrf.mxu0
  %v653 = vadd.f32 %v486, %v652
  %v654 = vpop.f32.mrf.mxu0
  %v655 = vadd.f32 %v488, %v654
  %656 = vmatprep.mubr.f32.mxu0 %v144
  %657 = vmatmul.mubr.f32.gmra.mxu0 %v143
  %v658 = vpop.f32.mrf.mxu0
  %v659 = vadd.f32 %v492, %v658
  %v660 = vpop.f32.mrf.mxu0
  %v661 = vadd.f32 %v494, %v660
  %662 = vmatprep.mubr.f32.mxu0 %v149
  %663 = vmatmul.mubr.f32.gmra.mxu0 %v148
  %v664 = vpop.f32.mrf.mxu0
  %v665 = vadd.f32 %v498, %v664
  %v666 = vpop.f32.mrf.mxu0
  %v667 = vadd.f32 %v500, %v666
  %668 = vmatprep.mubr.f32.mxu0 %v154
  %669 = vmatmul.mubr.f32.gmra.mxu0 %v153
  %v670 = vpop.f32.mrf.mxu0
  %v671 = vadd.f32 %v504, %v670
  %v672 = vpop.f32.mrf.mxu0
  %v673 = vadd.f32 %v506, %v672
  %674 = vmatprep.mubr.f32.mxu0 %v159
  %675 = vmatmul.mubr.f32.gmra.mxu0 %v158
  %v676 = vpop.f32.mrf.mxu0
  %v677 = vadd.f32 %v510, %v676
  %v678 = vpop.f32.mrf.mxu0
  %v679 = vadd.f32 %v512, %v678
  %680 = vmatprep.mubr.f32.mxu0 %v164
  %681 = vmatmul.mubr.f32.gmra.mxu0 %v163
  %v682 = vpop.f32.mrf.mxu0
  %v683 = vadd.f32 %v516, %v682
  %v684 = vpop.f32.mrf.mxu0
  %v685 = vadd.f32 %v518, %v684
  %686 = vmatprep.mubr.f32.mxu0 %v169
  %687 = vmatmul.mubr.f32.gmra.mxu0 %v168
  %v688 = vpop.f32.mrf.mxu0
  %v689 = vadd.f32 %v522, %v688
  %v690 = vpop.f32.mrf.mxu0
  %v691 = vadd.f32 %v524, %v690
  %692 = vmatprep.mubr.f32.mxu0 %v174
  %693 = vmatmul.mubr.f32.gmra.mxu0 %v173
  %v694 = vpop.f32.mrf.mxu0
  %v695 = vadd.f32 %v528, %v694
  %v696 = vpop.f32.mrf.mxu0
  %v697 = vadd.f32 %v530, %v696
  %698 = vmatprep.mubr.f32.mxu0 %v179
  %699 = vmatmul.mubr.f32.gmra.mxu0 %v178
  %v700 = vpop.f32.mrf.mxu0
  %v701 = vadd.f32 %v534, %v700
  %v702 = vpop.f32.mrf.mxu0
  %v703 = vadd.f32 %v536, %v702
  %704 = vmatprep.mubr.f32.mxu0 %v184
  %705 = vmatmul.mubr.f32.gmra.mxu0 %v183
  %v706 = vpop.f32.mrf.mxu0
  %v707 = vadd.f32 %v540, %v706
  %v708 = vpop.f32.mrf.mxu0
  %v709 = vadd.f32 %v542, %v708
  %710 = vmatprep.mubr.f32.mxu0 %v189
  %711 = vmatmul.mubr.f32.gmra.mxu0 %v188
  %v712 = vpop.f32.mrf.mxu0
  %v713 = vadd.f32 %v546, %v712
  %v714 = vpop.f32.mrf.mxu0
  %v715 = vadd.f32 %v548, %v714
  %716 = vmatprep.mubr.f32.mxu0 %v194
  %717 = vmatmul.mubr.f32.gmra.mxu0 %v193
  %v718 = vpop.f32.mrf.mxu0
  %v719 = vadd.f32 %v552, %v718
  %v720 = vpop.f32.mrf.mxu0
  %v721 = vadd.f32 %v554, %v720
  %722 = vmatprep.mubr.f32.mxu0 %v199
  %723 = vmatmul.mubr.f32.gmra.mxu0 %v198
  %v724 = vpop.f32.mrf.mxu0
  %v725 = vadd.f32 %v558, %v724
  %v726 = vpop.f32.mrf.mxu0
  %v727 = vadd.f32 %v560, %v726
  %728 = vmatprep.mubr.f32.mxu0 %v204
  %729 = vmatmul.mubr.f32.gmra.mxu0 %v203
  %v730 = vpop.f32.mrf.mxu0
  %v731 = vadd.f32 %v564, %v730
  %v732 = vpop.f32.mrf.mxu0
  %v733 = vadd.f32 %v566, %v732
  %734 = vmatprep.mubr.f32.mxu0 %v209
  %735 = vmatmul.mubr.f32.gmra.mxu0 %v208
  %v736 = vpop.f32.mrf.mxu0
  %v737 = vadd.f32 %v570, %v736
  %v738 = vpop.f32.mrf.mxu0
  %v739 = vadd.f32 %v572, %v738
  %740 = vdwg.mxu0
  %741 = vmatprep.subr.mxu0 0.0
  %742 = vmatpush1.msra.mxu0 0.0
  %743 = vmatprep.subr.mxu0 0.0
  %744 = vmatpush1.msra.mxu0 0.0
  %745 = vmatprep.subr.mxu0 0.0
  %746 = vmatpush1.msra.mxu0 0.0
  %747 = vmatprep.subr.mxu0 0.0
  %748 = vmatpush1.msra.mxu0 0.0
  %749 = vmatprep.subr.mxu0 0.0
  %750 = vmatpush1.msra.mxu0 0.0
  %751 = vmatprep.subr.mxu0 0.0
  %752 = vmatpush1.msra.mxu0 0.0
  %753 = vmatprep.subr.mxu0 0.0
  %754 = vmatpush1.msra.mxu0 0.0
  %755 = vmatprep.subr.mxu0 0.0
  %756 = vmatpush1.msra.mxu0 0.0
  %757 = vmatprep.subr.mxu0 %v354
  %758 = vmatpush1.msra.mxu0 %v353
  %759 = vmatprep.subr.mxu0 %v352
  %760 = vmatpush1.msra.mxu0 %v351
  %761 = vmatprep.subr.mxu0 %v350
  %762 = vmatpush1.msra.mxu0 %v349
  %763 = vmatprep.subr.mxu0 %v348
  %764 = vmatpush1.msra.mxu0 %v347
  %765 = vmatprep.subr.mxu0 %v346
  %766 = vmatpush1.msra.mxu0 %v345
  %767 = vmatprep.subr.mxu0 %v344
  %768 = vmatpush1.msra.mxu0 %v343
  %769 = vmatprep.subr.mxu0 %v342
  %770 = vmatpush1.msra.mxu0 %v341
  %771 = vmatprep.subr.mxu0 %v340
  %772 = vmatpush1.msra.mxu0 %v339
  %773 = vmatprep.subr.mxu0 0.0
  %774 = vmatpush2.msra.mxu0 0.0
  %775 = vmatprep.subr.mxu0 0.0
  %776 = vmatpush2.msra.mxu0 0.0
  %777 = vmatprep.subr.mxu0 0.0
  %778 = vmatpush2.msra.mxu0 0.0
  %779 = vmatprep.subr.mxu0 0.0
  %780 = vmatpush2.msra.mxu0 0.0
  %781 = vmatprep.subr.mxu0 0.0
  %782 = vmatpush2.msra.mxu0 0.0
  %783 = vmatprep.subr.mxu0 0.0
  %784 = vmatpush2.msra.mxu0 0.0
  %785 = vmatprep.subr.mxu0 0.0
  %786 = vmatpush2.msra.mxu0 0.0
  %787 = vmatprep.subr.mxu0 0.0
  %788 = vmatpush2.msra.mxu0 0.0
  %789 = vmatprep.subr.mxu0 0.0
  %790 = vmatpush2.msra.mxu0 0.0
  %791 = vmatprep.subr.mxu0 0.0
  %792 = vmatpush2.msra.mxu0 0.0
  %793 = vmatprep.subr.mxu0 0.0
  %794 = vmatpush2.msra.mxu0 0.0
  %795 = vmatprep.subr.mxu0 0.0
  %796 = vmatpush2.msra.mxu0 0.0
  %797 = vmatprep.subr.mxu0 0.0
  %798 = vmatpush2.msra.mxu0 0.0
  %799 = vmatprep.subr.mxu0 0.0
  %800 = vmatpush2.msra.mxu0 0.0
  %801 = vmatprep.subr.mxu0 0.0
  %802 = vmatpush2.msra.mxu0 0.0
  %803 = vmatprep.subr.mxu0 0.0
  %804 = vmatpush2.msra.mxu0 0.0
  %805 = vmatprep.mubr.f32.mxu0 0.0
  %806 = vmatmul.mubr.f32.gmra.mxu0 %v357
  %v807 = vpop.f32.mrf.mxu0
  %v808 = vadd.f32 %v641, %v807
  %v809 = vpop.f32.mrf.mxu0
  %v810 = vadd.f32 %v643, %v809
  %811 = vmatprep.mubr.f32.mxu0 0.0
  %812 = vmatmul.mubr.f32.gmra.mxu0 %v360
  %v813 = vpop.f32.mrf.mxu0
  %v814 = vadd.f32 %v647, %v813
  %v815 = vpop.f32.mrf.mxu0
  %v816 = vadd.f32 %v649, %v815
  %817 = vmatprep.mubr.f32.mxu0 0.0
  %818 = vmatmul.mubr.f32.gmra.mxu0 %v363
  %v819 = vpop.f32.mrf.mxu0
  %v820 = vadd.f32 %v653, %v819
  %v821 = vpop.f32.mrf.mxu0
  %v822 = vadd.f32 %v655, %v821
  %823 = vmatprep.mubr.f32.mxu0 0.0
  %824 = vmatmul.mubr.f32.gmra.mxu0 %v366
  %v825 = vpop.f32.mrf.mxu0
  %v826 = vadd.f32 %v659, %v825
  %v827 = vpop.f32.mrf.mxu0
  %v828 = vadd.f32 %v661, %v827
  %829 = vmatprep.mubr.f32.mxu0 0.0
  %830 = vmatmul.mubr.f32.gmra.mxu0 %v369
  %v831 = vpop.f32.mrf.mxu0
  %v832 = vadd.f32 %v665, %v831
  %v833 = vpop.f32.mrf.mxu0
  %v834 = vadd.f32 %v667, %v833
  %835 = vmatprep.mubr.f32.mxu0 0.0
  %836 = vmatmul.mubr.f32.gmra.mxu0 %v372
  %v837 = vpop.f32.mrf.mxu0
  %v838 = vadd.f32 %v671, %v837
  %v839 = vpop.f32.mrf.mxu0
  %v840 = vadd.f32 %v673, %v839
  %841 = vmatprep.mubr.f32.mxu0 0.0
  %842 = vmatmul.mubr.f32.gmra.mxu0 %v375
  %v843 = vpop.f32.mrf.mxu0
  %v844 = vadd.f32 %v677, %v843
  %v845 = vpop.f32.mrf.mxu0
  %v846 = vadd.f32 %v679, %v845
  %847 = vmatprep.mubr.f32.mxu0 0.0
  %848 = vmatmul.mubr.f32.gmra.mxu0 %v378
  %v849 = vpop.f32.mrf.mxu0
  %v850 = vadd.f32 %v683, %v849
  %v851 = vpop.f32.mrf.mxu0
  %v852 = vadd.f32 %v685, %v851
  %853 = vmatprep.mubr.f32.mxu0 0.0
  %854 = vmatmul.mubr.f32.gmra.mxu0 %v381
  %v855 = vpop.f32.mrf.mxu0
  %v856 = vadd.f32 %v689, %v855
  %v857 = vpop.f32.mrf.mxu0
  %v858 = vadd.f32 %v691, %v857
  %859 = vmatprep.mubr.f32.mxu0 0.0
  %860 = vmatmul.mubr.f32.gmra.mxu0 %v384
  %v861 = vpop.f32.mrf.mxu0
  %v862 = vadd.f32 %v695, %v861
  %v863 = vpop.f32.mrf.mxu0
  %v864 = vadd.f32 %v697, %v863
  %865 = vmatprep.mubr.f32.mxu0 0.0
  %866 = vmatmul.mubr.f32.gmra.mxu0 %v387
  %v867 = vpop.f32.mrf.mxu0
  %v868 = vadd.f32 %v701, %v867
  %v869 = vpop.f32.mrf.mxu0
  %v870 = vadd.f32 %v703, %v869
  %871 = vmatprep.mubr.f32.mxu0 0.0
  %872 = vmatmul.mubr.f32.gmra.mxu0 %v390
  %v873 = vpop.f32.mrf.mxu0
  %v874 = vadd.f32 %v707, %v873
  %v875 = vpop.f32.mrf.mxu0
  %v876 = vadd.f32 %v709, %v875
  %877 = vmatprep.mubr.f32.mxu0 0.0
  %878 = vmatmul.mubr.f32.gmra.mxu0 %v393
  %v879 = vpop.f32.mrf.mxu0
  %v880 = vadd.f32 %v713, %v879
  %v881 = vpop.f32.mrf.mxu0
  %v882 = vadd.f32 %v715, %v881
  %883 = vmatprep.mubr.f32.mxu0 0.0
  %884 = vmatmul.mubr.f32.gmra.mxu0 %v396
  %v885 = vpop.f32.mrf.mxu0
  %v886 = vadd.f32 %v719, %v885
  %v887 = vpop.f32.mrf.mxu0
  %v888 = vadd.f32 %v721, %v887
  %889 = vmatprep.mubr.f32.mxu0 0.0
  %890 = vmatmul.mubr.f32.gmra.mxu0 %v399
  %v891 = vpop.f32.mrf.mxu0
  %v892 = vadd.f32 %v725, %v891
  %v893 = vpop.f32.mrf.mxu0
  %v894 = vadd.f32 %v727, %v893
  %895 = vmatprep.mubr.f32.mxu0 0.0
  %896 = vmatmul.mubr.f32.gmra.mxu0 %v402
  %v897 = vpop.f32.mrf.mxu0
  %v898 = vadd.f32 %v731, %v897
  %v899 = vpop.f32.mrf.mxu0
  %v900 = vadd.f32 %v733, %v899
  %901 = vmatprep.mubr.f32.mxu0 0.0
  %902 = vmatmul.mubr.f32.gmra.mxu0 %v405
  %v903 = vpop.f32.mrf.mxu0
  %v904 = vadd.f32 %v737, %v903
  %v905 = vpop.f32.mrf.mxu0
  %v906 = vadd.f32 %v739, %v905
  %907 = vdwg.mxu0
  %908 = vst [vmem:[%s3] sm:$0xff] %v808
  %vm909 = vcmask 556032
  %910 = vst.msk [vmem:[%s3 + $0x8] sm:$0xff] %vm909, %v810
  %911 = vst [vmem:[%s3 + $0x10] sm:$0xff] %v814
  %912 = vst.msk [vmem:[%s3 + $0x18] sm:$0xff] %vm909, %v816
  %913 = vst [vmem:[%s3 + $0x20] sm:$0xff] %v820
  %914 = vst.msk [vmem:[%s3 + $0x28] sm:$0xff] %vm909, %v822
  %915 = vst [vmem:[%s3 + $0x30] sm:$0xff] %v826
  %916 = vst.msk [vmem:[%s3 + $0x38] sm:$0xff] %vm909, %v828
  %917 = vst [vmem:[%s3 + $0x40] sm:$0xff] %v832
  %918 = vst.msk [vmem:[%s3 + $0x48] sm:$0xff] %vm909, %v834
  %919 = vst [vmem:[%s3 + $0x50] sm:$0xff] %v838
  %920 = vst.msk [vmem:[%s3 + $0x58] sm:$0xff] %vm909, %v840
  %921 = vst [vmem:[%s3 + $0x60] sm:$0xff] %v844
  %922 = vst.msk [vmem:[%s3 + $0x68] sm:$0xff] %vm909, %v846
  %923 = vst [vmem:[%s3 + $0x70] sm:$0xff] %v850
  %924 = vst.msk [vmem:[%s3 + $0x78] sm:$0xff] %vm909, %v852
  %925 = vst [vmem:[%s3 + $0x80] sm:$0xff] %v856
  %926 = vst.msk [vmem:[%s3 + $0x88] sm:$0xff] %vm909, %v858
  %927 = vst [vmem:[%s3 + $0x90] sm:$0xff] %v862
  %928 = vst.msk [vmem:[%s3 + $0x98] sm:$0xff] %vm909, %v864
  %929 = vst [vmem:[%s3 + $0xa0] sm:$0xff] %v868
  %930 = vst.msk [vmem:[%s3 + $0xa8] sm:$0xff] %vm909, %v870
  %931 = vst [vmem:[%s3 + $0xb0] sm:$0xff] %v874
  %932 = vst.msk [vmem:[%s3 + $0xb8] sm:$0xff] %vm909, %v876
  %933 = vst [vmem:[%s3 + $0xc0] sm:$0xff] %v880
  %934 = vst.msk [vmem:[%s3 + $0xc8] sm:$0xff] %vm909, %v882
  %935 = vst [vmem:[%s3 + $0xd0] sm:$0xff] %v886
  %936 = vst.msk [vmem:[%s3 + $0xd8] sm:$0xff] %vm909, %v888
  %937 = vst [vmem:[%s3 + $0xe0] sm:$0xff] %v892
  %938 = vst.msk [vmem:[%s3 + $0xe8] sm:$0xff] %vm909, %v894
  %939 = vst [vmem:[%s3 + $0xf0] sm:$0xff] %v898
  %940 = vst.msk [vmem:[%s3 + $0xf8] sm:$0xff] %vm909, %v900
  %941 = vst [vmem:[%s3 + $0x100] sm:$0xff] %v904
  %942 = vst.msk [vmem:[%s3 + $0x108] sm:$0xff] %vm909, %v906
  // Predicated region
  $region14: #{mul_conv1x1.1} parent=0 // pred_check
    _
  $region15: #{mul_conv1x1.1} parent=0 // pred_check_branch
    %944 = sbr.rel (0) target = $region17
  $region16: #{mul_conv1x1.1} parent=0 // pred_region
    _
  $region17: #{mul_conv1x1.1} parent=0 // pred_fallthru
    _
  // Predicated region
  $region18: #{mul_conv1x1.1} parent=0 // pred_check
    _
  $region19: #{mul_conv1x1.1} parent=0 // pred_check_branch
    %946 = sbr.rel (0) target = $region21
  $region20: #{mul_conv1x1.1} parent=0 // pred_region
    _
  $region21: #{mul_conv1x1.1} parent=0 // pred_fallthru
    _

</llo_original>
